<compile_context>
chip_gen: v6e
topology: v6e:2x2x1
jax: 0.10.0
libtpu: 0.0.40
codegen_flags: <defaults>
</compile_context>

<pallas_src>
import functools

import jax
import jax.numpy as jnp
from jax import lax
from jax.experimental import pallas as pl
from jax.experimental.pallas import tpu as pltpu


def _round_up(x, m):
    return ((x + m - 1) // m) * m


def _softplus_partial_kernel(score_ref, out_ref, *,
                             n_i, n_c, tile_m, tile_c, n_sub,
                             mask_rows, mask_cols):
    """Per-row-tile partial sums of softplus(x) = max(x,0) + log1p(exp(-|x|)).

    The one-hot (target) term of BCE-with-logits is handled in the wrapper as
    a tiny gather, so no one-hot is constructed in-kernel.

    score_ref : (tile_m, tile_c)   logits tile, native dtype (cast to f32 here)
    out_ref   : (1, n_sub, tile_c) f32 partial sums, accumulated over j
    """
    i = pl.program_id(0)          # row-tile index   ("parallel")
    j = pl.program_id(1)          # column-tile index ("arbitrary", reduction)

    @pl.when(j == 0)
    def _init():
        out_ref[...] = jnp.zeros_like(out_ref)

    x = score_ref[...].astype(jnp.float32)                 # (tile_m, tile_c)
    loss = jnp.maximum(x, 0.0) + jnp.log1p(jnp.exp(-jnp.abs(x)))

    # Ragged-edge masking with 1-D iotas; the select broadcasts them.
    if mask_rows:
        rows = i * tile_m + lax.broadcasted_iota(jnp.int32, (tile_m, 1), 0)
        loss = jnp.where(rows < n_i, loss, 0.0)
    if mask_cols:
        cols = j * tile_c + lax.broadcasted_iota(jnp.int32, (1, tile_c), 1)
        loss = jnp.where(cols < n_c, loss, 0.0)

    # Sublane-aligned partial reduce (pure VPU adds). The final cross-sublane
    # 8->1 reduce is done once, outside the kernel, on the tiny output.
    if n_sub == tile_m:
        part = loss
    elif n_sub == 1:
        part = jnp.sum(loss, axis=0, keepdims=True)
    else:
        part = jnp.sum(loss.reshape(tile_m // n_sub, n_sub, tile_c), axis=0)

    out_ref[...] += part[None]


def sigmoid_cross_entropy_loss(cls_score, label, *, loss_weight=1.0,
                               tile_m=None, tile_c=None):
    """Pallas implementation of SigmoidCrossEntropyLoss.forward.

    cls_score : (n_i, n_c) float array of logits (f32 / bf16 / f16, streamed as-is)
    label     : (n_i,)     int array of gt class indices in [0, n_c)
    returns scalar f32 loss = loss_weight * sum(BCEWithLogits(x, one_hot(label))) / n_i.
    """
    n_i, n_c = cls_score.shape
    itemsize = cls_score.dtype.itemsize
    label = jnp.asarray(label).astype(jnp.int32)

    # ---- column tile: lane-dense, multiple of 128 (or full extent), up to 2048.
    if tile_c is None:
        tile_c = 2048
    if tile_c < n_c:
        tile_c = _round_up(tile_c, 128)
    if tile_c >= n_c:
        tile_c = n_c

    # ---- row tile: byte-based (~4 MiB logits block => ~8 MiB double-buffered,
    # well under the 32 MiB scoped-VMEM limit on v7x), multiple of 8 (or full
    # extent), and split into >=2 row tiles when possible so the "parallel"
    # axis shards across both TensorCores on v7x.
    if tile_m is None:
        tile_m = max(8, (4 * 1024 * 1024) // max(1, tile_c * itemsize))
        tile_m = min(tile_m, 2048)
    if n_i > 8:
        tile_m = min(tile_m, pl.cdiv(n_i, 2))
    tile_m = _round_up(tile_m, 8)
    if tile_m >= n_i:
        tile_m = n_i

    n_sub = 8 if (tile_m % 8 == 0) else 1

    grid_m = pl.cdiv(n_i, tile_m)
    grid_c = pl.cdiv(n_c, tile_c)

    kernel = functools.partial(
        _softplus_partial_kernel,
        n_i=n_i, n_c=n_c, tile_m=tile_m, tile_c=tile_c, n_sub=n_sub,
        mask_rows=(n_i % tile_m) != 0, mask_cols=(n_c % tile_c) != 0)

    bytes_accessed = (n_i * n_c * itemsize            # logits, read once
                      + grid_m * n_sub * tile_c * 4)  # partial-sum output
    cost = pl.CostEstimate(flops=4 * n_i * n_c,
                           transcendentals=2 * n_i * n_c,
                           bytes_accessed=bytes_accessed)

    partials = pl.pallas_call(
        kernel,
        out_shape=jax.ShapeDtypeStruct((grid_m, n_sub, tile_c), jnp.float32),
        grid_spec=pltpu.PrefetchScalarGridSpec(
            num_scalar_prefetch=0,
            grid=(grid_m, grid_c),
            in_specs=[pl.BlockSpec((tile_m, tile_c), lambda i, j: (i, j))],
            out_specs=pl.BlockSpec((1, n_sub, tile_c), lambda i, j: (i, 0, 0)),
        ),
        compiler_params=pltpu.CompilerParams(
            dimension_semantics=("parallel", "arbitrary"),
            vmem_limit_bytes=32 * 1024 * 1024),
        cost_estimate=cost,
    )(cls_score)

    # sum(BCE) = sum(softplus(x)) - sum_i x[i, label[i]]  (tiny gather in XLA).
    gathered = jnp.take_along_axis(cls_score, label.reshape(n_i, 1), axis=1)
    total = jnp.sum(partials) - jnp.sum(gathered.astype(jnp.float32))
    return (total * (float(loss_weight) / n_i)).astype(jnp.float32)


def _reference(cls_score, label, loss_weight=1.0):
    n_i, n_c = cls_score.shape
    x = cls_score.astype(jnp.float32)
    tgt = jax.nn.one_hot(label, n_c, dtype=jnp.float32)
    loss = jnp.maximum(x, 0.0) - x * tgt + jnp.log1p(jnp.exp(-jnp.abs(x)))
    return loss_weight * jnp.sum(loss) / n_i


if __name__ == "__main__":
    key = jax.random.PRNGKey(0)
    k1, k2, k3, k4 = jax.random.split(key, 4)

    # Case 1: aligned shapes, f32 logits (n_i=16 ROIs, n_c=256 class channels).
    n_i, n_c = 16, 256
    cls_score = jax.random.normal(k1, (n_i, n_c), dtype=jnp.float32) * 2.0
    label = jax.random.randint(k2, (n_i,), 0, n_c, dtype=jnp.int32)
    loss = jax.block_until_ready(sigmoid_cross_entropy_loss(cls_score, label))
    ref = _reference(cls_score, label)
    assert jnp.allclose(loss, ref, rtol=1e-5, atol=1e-5), (loss, ref)

    # Case 2: ragged shapes + bf16 logits, small tiles to exercise edge masking.
    n_i, n_c = 20, 300
    cls_score = (jax.random.normal(k3, (n_i, n_c), dtype=jnp.float32) * 2.0
                 ).astype(jnp.bfloat16)
    label = jax.random.randint(k4, (n_i,), 0, n_c, dtype=jnp.int32)
    loss = jax.block_until_ready(
        sigmoid_cross_entropy_loss(cls_score, label, loss_weight=0.5,
                                   tile_m=8, tile_c=128))
    ref = _reference(cls_score, label, loss_weight=0.5)
    assert jnp.allclose(loss, ref, rtol=1e-4, atol=1e-4), (loss, ref)

    print("KERNEL_OK")
</pallas_src>

<mosaic_0001>
module attributes {stable_mosaic.version = 11 : i64} {
  func.func @_softplus_partial_kernel(%arg0: i32, %arg1: i32, %arg2: memref<8x256xf32, #tpu.memory_space<vmem>>, %arg3: memref<1x8x256xf32, #tpu.memory_space<vmem>>) attributes {dimension_semantics = [#tpu.dimension_semantics<parallel>, #tpu.dimension_semantics<arbitrary>], iteration_bounds = array<i64: 2, 1>, scalar_prefetch = 0 : i64, scratch_operands = 0 : i64, tpu.core_type = #tpu.core_type<tc>, window_params = [{transform_indices = @transform_0, window_bounds = array<i64: 8, 256>}, {transform_indices = @transform_1, window_bounds = array<i64: 1, 8, 256>}]} {
    %c0_i32 = arith.constant 0 : i32
    %0 = arith.cmpi eq, %arg1, %c0_i32 : i32
    %1 = arith.extui %0 : i1 to i32
    %c0_i32_0 = arith.constant 0 : i32
    %2 = arith.cmpi ne, %1, %c0_i32_0 : i32
    scf.if %2 {
      %cst_9 = arith.constant 0.000000e+00 : f32
      %16 = vector.broadcast %cst_9 : f32 to vector<1x8x256xf32>
      %c0_10 = arith.constant 0 : index
      %c0_11 = arith.constant 0 : index
      %c0_12 = arith.constant 0 : index
      %17 = vector.load %arg3[%c0_10, %c0_11, %c0_12] : memref<1x8x256xf32, #tpu.memory_space<vmem>>, vector<1x8x256xf32>
      tpu.vector_store %arg3[%c0_10, %c0_11, %c0_12], %16 {strides = array<i32>} : memref<1x8x256xf32, #tpu.memory_space<vmem>>, vector<1x8x256xf32>,
    } else {
    }
    %c0 = arith.constant 0 : index
    %c0_1 = arith.constant 0 : index
    %3 = vector.load %arg2[%c0, %c0_1] : memref<8x256xf32, #tpu.memory_space<vmem>>, vector<8x256xf32>
    %cst = arith.constant 0.000000e+00 : f32
    %4 = vector.broadcast %cst : f32 to vector<8x256xf32>
    %5 = arith.maximumf %3, %4 : vector<8x256xf32>
    %6 = math.absf %3 : vector<8x256xf32>
    %cst_2 = arith.constant 0.000000e+00 : f32
    %7 = vector.broadcast %cst_2 : f32 to vector<8x256xf32>
    %8 = arith.subf %7, %6 : vector<8x256xf32>
    %9 = math.exp %8 : vector<8x256xf32>
    %10 = math.log1p %9 : vector<8x256xf32>
    %11 = arith.addf %5, %10 : vector<8x256xf32>
    %c0_3 = arith.constant 0 : index
    %c0_4 = arith.constant 0 : index
    %c0_5 = arith.constant 0 : index
    %12 = vector.load %arg3[%c0_3, %c0_4, %c0_5] : memref<1x8x256xf32, #tpu.memory_space<vmem>>, vector<1x8x256xf32>
    %13 = vector.shape_cast %11 : vector<8x256xf32> to vector<1x8x256xf32>
    %14 = arith.addf %12, %13 : vector<1x8x256xf32>
    %c0_6 = arith.constant 0 : index
    %c0_7 = arith.constant 0 : index
    %c0_8 = arith.constant 0 : index
    %15 = vector.load %arg3[%c0_6, %c0_7, %c0_8] : memref<1x8x256xf32, #tpu.memory_space<vmem>>, vector<1x8x256xf32>
    tpu.vector_store %arg3[%c0_6, %c0_7, %c0_8], %14 {strides = array<i32>} : memref<1x8x256xf32, #tpu.memory_space<vmem>>, vector<1x8x256xf32>,
    return
  }
  func.func @transform_0(%arg0: i32, %arg1: i32) -> (i32, i32) {
    %c0_i32 = arith.constant 0 : i32
    return %arg0, %arg1 : i32, i32
  }
  func.func @transform_1(%arg0: i32, %arg1: i32) -> (i32, i32, i32) {
    %c0_i32 = arith.constant 0 : i32
    %c0_i32_0 = arith.constant 0 : i32
    %c0_i32_1 = arith.constant 0 : i32
    return %arg0, %c0_i32, %c0_i32_0 : i32, i32, i32
  }
}

</mosaic_0001>

<llo_original>
// kernel: tpu_custom_call.1
$region0: #{tpu_custom_call.1}
  #allocation0 [shape = 'u32[]', space=smem, size = 0x4, offset = 0x4, fixed_abs, tag = 'smem constant byte address 0x4 - core index']
  #allocation1 [shape = 'u32[144,128]{1,0:T(1,128)}', space=vmem, size = 0x12000, scoped, tag = 'internal scratch']
  %s0 = inlined_call_operand.hbm [shape: f32[16,256], index: 0, kind: input, shape index: {}]
  %s1 = inlined_call_operand.hbm [shape: f32[2,8,256], index: 1, kind: output, shape index: {}]
  %s2 = sld [smem:[#allocation0]]
  $region45: #{tpu_custom_call.1} parent=0
    _
  %s4 = ssub.s32 1, %s2
  %s5 = scalar_select 0, %s4, %s2
  $region1: #{tpu_custom_call.1} parent=0
    #allocation2 [shape = 'u8[16384]{0}', space=vmem, size = 0x4000, scoped, tag = 'input window, operand 0']
    #allocation3 [shape = 's32[2]{0}', space=sflag, size = 0x8, scoped, tag = 'scoped memory for tpu_custom_call.1']
    #allocation4 [shape = 's32[2]{0}', space=sflag, size = 0x8, scoped, tag = 'scoped memory for tpu_custom_call.1']
    #allocation5 [shape = 'u8[16384]{0}', space=vmem, size = 0x4000, scoped, tag = 'output window, operand 0']
    %6 = vsyncpa [#allocation3], 0
    %s7 = scalar_lea.sflag [#allocation3], 1
    %8 = vsyncpa %s7, 0
    %9 = vsyncpa [#allocation4], 0
    %s10 = scalar_lea.sflag [#allocation4], 1
    %11 = vsyncpa %s10, 0
    loop: start=0, step=1, limit=4
    $region2: #{tpu_custom_call.1} parent=1 // loop_pre_header
      _
    $region3: #{tpu_custom_call.1} parent=1 // loop_header
      %s13 = sphi 0, %s17
      %p14 = scmp.ge.s32.totalorder %s13, 4
      %s20 = sphi 0, %s32
      %s21 = sphi 0, %s28
      %s22 = sphi 0, %s20
      %s23 = sphi 0, %s21
      %s24 = sphi 0, %s22
      %s25 = sphi 0, %s23
      %s37 = sphi 0, %s39
      %s40 = sphi 0, %s37
      %s41 = sphi 0, %s40
      %s57 = sphi 0, %s41
      %s63 = sphi 0, %s65
      %s66 = sphi 0, %s63
      %s67 = sphi 0, %s66
      %s83 = sphi 0, %s67
    $region4: #{tpu_custom_call.1} parent=1 // loop_header_branch
      %16 = sbr.rel (%p14) target = $region8
    $region5: #{tpu_custom_call.1} parent=1 // loop_body
      %s18 = ssub.s32 %s13, 1
      %s19 = ssub.s32 %s13, 2
      %s26 = sadd.s32 1, %s21
      %p27 = scmp.ge.s32.totalorder %s26, 1
      %s28 = scalar_select %p27, 0, %s26
      %s29 = sadd.s32 1, %s20
      %s30 = scalar_select %p27, %s29, %s20
      %p31 = scmp.ge.s32.totalorder %s30, 2
      %s32 = scalar_select %p31, 0, %s30
      %s33 = ssub.s32 %s20, %s32
      %s34 = ssub.s32 %s21, %s28
      %s35 = sor.u32 %s33, %s34
      %p36 = scmp.eq.s32.totalorder %s35, 0
      %s38 = sadd.s32 %s37, 1
      %s39 = scalar_select %p36, %s37, %s38
      %p42 = pneg %p36
      %p43 = scmp.eq.s32.totalorder %s13, 1
      %p44 = por %p42, %p43
      %p45 = scmp.ne.s32.totalorder %s37, %s40
      %p46 = scmp.eq.s32.totalorder %s13, 0
      %p47 = por %p45, %p46
      %p48 = scmp.ne.s32.totalorder %s37, %s40
      %p49 = scmp.eq.s32.totalorder %s18, 1
      %p50 = por %p48, %p49
      %p51 = scmp.ne.s32.totalorder %s40, %s41
      %p52 = scmp.eq.s32.totalorder %s18, 0
      %p53 = por %p51, %p52
      %p54 = scmp.ne.s32.totalorder %s40, %s41
      %p55 = scmp.eq.s32.totalorder %s19, 1
      %p56 = por %p54, %p55
      %p58 = scmp.ne.s32.totalorder %s41, %s57
      %p59 = scmp.eq.s32.totalorder %s19, 0
      %p60 = por %p58, %p59
      %s61 = ssub.s32 %s20, %s32
      %p62 = scmp.eq.s32.totalorder %s61, 0
      %s64 = sadd.s32 %s63, 1
      %s65 = scalar_select %p62, %s63, %s64
      %p68 = pneg %p62
      %p69 = scmp.eq.s32.totalorder %s13, 1
      %p70 = por %p68, %p69
      %p71 = scmp.ne.s32.totalorder %s63, %s66
      %p72 = scmp.eq.s32.totalorder %s13, 0
      %p73 = por %p71, %p72
      %p74 = scmp.ne.s32.totalorder %s63, %s66
      %p75 = scmp.eq.s32.totalorder %s18, 1
      %p76 = por %p74, %p75
      %p77 = scmp.ne.s32.totalorder %s66, %s67
      %p78 = scmp.eq.s32.totalorder %s18, 0
      %p79 = por %p77, %p78
      %p80 = scmp.ne.s32.totalorder %s66, %s67
      %p81 = scmp.eq.s32.totalorder %s19, 1
      %p82 = por %p80, %p81
      %p84 = scmp.ne.s32.totalorder %s67, %s83
      %p85 = scmp.eq.s32.totalorder %s19, 0
      %p86 = por %p84, %p85
      %p87 = scmp.le.s32.totalorder 1, %s13
      %p88 = scmp.lt.s32.totalorder %s13, 3
      %p89 = pnand %p87, %p88
      %p90 = pneg %p89
      // Predicated region
      $region9: #{tpu_custom_call.1} parent=5 // pred_check
        _
      $region10: #{tpu_custom_call.1} parent=5 // pred_check_branch
        %92 = sbr.rel (%p89) target = $region12
      $region11: #{tpu_custom_call.1} parent=5 // pred_region
        %s93 = ssub.s32 %s13, 1
      $region12: #{tpu_custom_call.1} parent=5 // pred_fallthru
        _
      %p94 = scmp.lt.s32.totalorder %s13, 2
      // Predicated region
      $region13: #{tpu_custom_call.1} parent=5 // pred_check
        %p95 = pneg %p94
      $region14: #{tpu_custom_call.1} parent=5 // pred_check_branch
        %97 = sbr.rel (%p95) target = $region16
      $region15: #{tpu_custom_call.1} parent=5 // pred_region
        // Predicated region
        $region17: #{tpu_custom_call.1} parent=15 // pred_check
          %p98 = pneg %p47
        $region18: #{tpu_custom_call.1} parent=15 // pred_check_branch
          %100 = sbr.rel (%p98) target = $region20
        $region19: #{tpu_custom_call.1} parent=15 // pred_region
          %s101 = sand.u32 %s37, 1
          %s102 = scalar_lea.sflag [#allocation3], %s101
          %s103 = sand.u32 %s37, 1
          %s104 = smul.addr %s103, 16
          %s105 = scalar_lea.vmem [#allocation2], %s104
          %s106 = smul.u32 2, %s21
          %s108 = ssub.s32 256, 256
          %109 = vsyncadd %s102, %s108
          %s110 = smul.addr %s20, 2
          %s111 = sadd.s32 %s106, %s110
          %s112 = smul.addr %s111, 128
          %s113 = scalar_lea.hbm %s0, %s112
          %s115 = sshll.u32 %s105, 4
          %s116 = int_to_ptr.vmem [resolvable:$true] %s115
          %118 = dma.hbm_to_vmem [thread:$0]  %s113, 256, %s116, %s102
        $region20: #{tpu_custom_call.1} parent=15 // pred_fallthru
          _
      $region16: #{tpu_custom_call.1} parent=5 // pred_fallthru
        _
      %p119 = scmp.le.s32.totalorder 1, %s13
      %p120 = scmp.lt.s32.totalorder %s13, 3
      %p121 = pnand %p119, %p120
      %p122 = pneg %p121
      // Predicated region
      $region21: #{tpu_custom_call.1} parent=5 // pred_check
        _
      $region22: #{tpu_custom_call.1} parent=5 // pred_check_branch
        %124 = sbr.rel (%p121) target = $region24
      $region23: #{tpu_custom_call.1} parent=5 // pred_region
        %s125 = ssub.s32 %s13, 1
        %s126 = sand.u32 %s40, 1
        %s127 = scalar_lea.sflag [#allocation3], %s126
        %s128 = sand.u32 %s40, 1
        %s129 = smul.addr %s128, 16
        %s130 = scalar_lea.vmem [#allocation2], %s129
        // Predicated region
        $region25: #{tpu_custom_call.1} parent=23 // pred_check
          %p131 = pneg %p53
        $region26: #{tpu_custom_call.1} parent=23 // pred_check_branch
          %133 = sbr.rel (%p131) target = $region28
        $region27: #{tpu_custom_call.1} parent=23 // pred_region
          %134 = dma.done %s127, 256
        $region28: #{tpu_custom_call.1} parent=23 // pred_fallthru
          _
        %s135 = sand.u32 %s40, 1
        %s136 = scalar_lea.sflag [#allocation3], %s135
        %s137 = sand.u32 %s40, 1
        %s138 = smul.addr %s137, 16
        %s139 = scalar_lea.vmem [#allocation2], %s138
        %p140 = pneg %p53
        %p141 = pneg %p50
        %p142 = pneg %p79
        %p143 = pneg %p76
        %s144 = sand.u32 %s66, 1
        %s145 = scalar_lea.sflag [#allocation4], %s144
        %s146 = sand.u32 %s66, 1
        %s147 = smul.addr %s146, 16
        %s148 = scalar_lea.vmem [#allocation5], %s147
        %s149 = smul.u32 2, %s23
        %p150 = scmp.eq.s32.totalorder %s23, 0
        // Predicated region
        $region29: #{tpu_custom_call.1} parent=23 // pred_check
          %p151 = pneg %p150
        $region30: #{tpu_custom_call.1} parent=23 // pred_check_branch
          %153 = sbr.rel (%p151) target = $region32
        $region31: #{tpu_custom_call.1} parent=23 // pred_region
          %154 = vst [vmem:[%s148] sm:$0xff] 0.0
          %155 = vst [vmem:[%s148 + $0x8] sm:$0xff] 0.0
        $region32: #{tpu_custom_call.1} parent=23 // pred_fallthru
          _
        %v156 = vld [vmem:[%s130] sm:$0xff]
        %v157 = vld [vmem:[%s130 + $0x8] sm:$0xff]
        %v158 = vmax.f32 %v156, 0.0
        %v159 = vmax.f32 %v157, 0.0
        %v160 = vand.u32 2147483647, %v156
        %v161 = vand.u32 2147483647, %v157
        %v162 = vsub.f32 0.0, %v160
        %v163 = vsub.f32 0.0, %v161
        %v164 = vmul.f32 %v162, 1.442695
        %v165 = vpow.pop %v164
        %v166 = vmul.f32 %v163, 1.442695
        %v167 = vpow.pop %v166
        %v168 = vadd.f32 %v165, 1.0
        %v169 = vlog2.pop %v168
        %v170 = vmul.f32 %v169, 0.6931472
        %v171 = vmul.f32 -0.5, %v165
        %v172 = vadd.f32 %v171, 1.0
        %v173 = vmul.f32 %v172, %v165
        %v174 = vand.u32 2147483647, %v165
        %vm175 = vcmp.lt.f32.partialorder %v174, 0.0004427343
        %v176 = vsel %vm175, %v173, %v170
        %v177 = vadd.f32 %v167, 1.0
        %v178 = vlog2.pop %v177
        %v179 = vmul.f32 %v178, 0.6931472
        %v180 = vmul.f32 -0.5, %v167
        %v181 = vadd.f32 %v180, 1.0
        %v182 = vmul.f32 %v181, %v167
        %v183 = vand.u32 2147483647, %v167
        %vm184 = vcmp.lt.f32.partialorder %v183, 0.0004427343
        %v185 = vsel %vm184, %v182, %v179
        %v186 = vadd.f32 %v158, %v176
        %v187 = vadd.f32 %v159, %v185
        %v188 = vld [vmem:[%s148] sm:$0xff]
        %v189 = vld [vmem:[%s148 + $0x8] sm:$0xff]
        %v190 = vadd.f32 %v188, %v186
        %v191 = vadd.f32 %v189, %v187
        %192 = vst [vmem:[%s148] sm:$0xff] %v190
        %193 = vst [vmem:[%s148 + $0x8] sm:$0xff] %v191
        %s194 = sand.u32 %s66, 1
        %s195 = scalar_lea.sflag [#allocation4], %s194
        %s196 = sand.u32 %s66, 1
        %s197 = smul.addr %s196, 16
        %s198 = scalar_lea.vmem [#allocation5], %s197
        // Predicated region
        $region33: #{tpu_custom_call.1} parent=23 // pred_check
          %p199 = pneg %p76
        $region34: #{tpu_custom_call.1} parent=23 // pred_check_branch
          %201 = sbr.rel (%p199) target = $region36
        $region35: #{tpu_custom_call.1} parent=23 // pred_region
          %s203 = ssub.s32 256, 256
          %204 = vsyncadd %s195, %s203
          %s205 = smul.addr %s22, 2
          %s206 = smul.addr %s205, 128
          %s207 = scalar_lea.hbm %s1, %s206
          %s209 = sshll.u32 %s198, 4
          %s210 = int_to_ptr.vmem [resolvable:$true] %s209
          %212 = dma.vmem_to_hbm [thread:$0]  %s210, 256, %s207, %s195
        $region36: #{tpu_custom_call.1} parent=23 // pred_fallthru
          _
      $region24: #{tpu_custom_call.1} parent=5 // pred_fallthru
        _
      %p213 = scmp.le.s32.totalorder 2, %s13
      // Predicated region
      $region37: #{tpu_custom_call.1} parent=5 // pred_check
        %p214 = pneg %p213
      $region38: #{tpu_custom_call.1} parent=5 // pred_check_branch
        %216 = sbr.rel (%p214) target = $region40
      $region39: #{tpu_custom_call.1} parent=5 // pred_region
        %s217 = ssub.s32 %s13, 2
        // Predicated region
        $region41: #{tpu_custom_call.1} parent=39 // pred_check
          %p218 = pneg %p82
        $region42: #{tpu_custom_call.1} parent=39 // pred_check_branch
          %220 = sbr.rel (%p218) target = $region44
        $region43: #{tpu_custom_call.1} parent=39 // pred_region
          %s221 = sand.u32 %s67, 1
          %s222 = scalar_lea.sflag [#allocation4], %s221
          %s223 = sand.u32 %s67, 1
          %s224 = smul.addr %s223, 16
          %s225 = scalar_lea.vmem [#allocation5], %s224
          %226 = dma.done %s222, 256
        $region44: #{tpu_custom_call.1} parent=39 // pred_fallthru
          _
      $region40: #{tpu_custom_call.1} parent=5 // pred_fallthru
        _
    $region6: #{tpu_custom_call.1} parent=1 // loop_footer
      %s17 = sadd.s32 1, %s13
    $region7: #{tpu_custom_call.1} parent=1 // loop_footer_branch
      %12 = sbr.rel target = $region3
    $region8: #{tpu_custom_call.1} parent=1 // loop_exit
      _
    %227 = vsyncpa [#allocation3], 1
    %s228 = scalar_lea.sflag [#allocation3], 1
    %229 = vsyncpa %s228, 1
    %230 = vsyncpa [#allocation4], 1
    %s231 = scalar_lea.sflag [#allocation4], 1
    %232 = vsyncpa %s231, 1

</llo_original>
